<compile_context>
chip_gen: v7x
topology: tpu7x:2x2x1
jax: 0.10.0
libtpu: 0.0.40
codegen_flags: <defaults>
</compile_context>

<pallas_src>
import functools

import jax
import jax.numpy as jnp
from jax.experimental import pallas as pl
from jax.experimental.pallas import tpu as pltpu

# ----------------------------- config (small, lane-dense) -----------------------------
B = 2             # batch
S = 64            # sequence length
H = 128           # hidden_size       (multiple of 128 -> lane-dense stores)
FFN_DIM = 256     # intermediate size (multiple of 128)
N_SWITCH = 4      # experts inside SwitchFeedForward
FFN_TILE_T = 64   # dense token tile: 2 grid steps at T=128 so v7x's 2 TCs both get work
MOE_TILE_T = 32   # routed token tile (expert groups padded to this); empty tiles skipped


# ----------------------------- Pallas kernels -----------------------------

def _ffn_kernel(x_ref, w1_ref, b1_ref, w2_ref, b2_ref, o_ref):
    """Fused Linear -> GELU -> Linear on one [tile_t, H] token tile.

    f32 activations arrive straight from HBM; the bf16 cast happens here (VPU slots are
    free under the MXU work).  Accumulation, bias and GELU math stay f32.
    """
    x = x_ref[...].astype(jnp.bfloat16)
    h = jnp.dot(x, w1_ref[...], preferred_element_type=jnp.float32) + b1_ref[...]
    # TODO(synk): the FeedForward helper class is not given; assuming tanh-approx GELU
    # (use jax.nn.gelu(h, approximate=False) for PyTorch nn.GELU exact-erf parity).
    h = jax.nn.gelu(h)
    o_ref[...] = (
        jnp.dot(h.astype(jnp.bfloat16), w2_ref[...], preferred_element_type=jnp.float32)
        + b2_ref[...]
    )


def _moe_ffn_kernel(te_ref, nvalid_ref, x_ref, fac_ref,
                    w1_ref, b1_ref, w2_ref, b2_ref, o_ref):
    """Routed fused FFN tile.

    All E expert weight sets are VMEM-resident (constant index_map); the tile's expert is
    selected via a dynamic leading-axis index from the SMEM-prefetched tile_expert table.
    The router probability is folded in before the store.  Fully-padded tiles (valid
    count 0) skip all compute; their output rows are never read back.
    """
    t = pl.program_id(0)
    e = te_ref[t]

    @pl.when(nvalid_ref[t] > 0)
    def _():
        h = jnp.dot(x_ref[...], w1_ref[e], preferred_element_type=jnp.float32) + b1_ref[e]
        h = jax.nn.gelu(h)
        y = (jnp.dot(h.astype(jnp.bfloat16), w2_ref[e],
                     preferred_element_type=jnp.float32) + b2_ref[e])
        o_ref[...] = y * fac_ref[...]


# ----------------------------- pallas_call wrappers -----------------------------

def pallas_ffn(x, w1, b1, w2, b2):
    """Dense FeedForward over f32 [T, H] tokens, tiled over the token dim."""
    T, Hx = x.shape
    F = w1.shape[1]
    O = w2.shape[1]
    tile_t = min(FFN_TILE_T, T)
    assert T % tile_t == 0
    cost = pl.CostEstimate(
        flops=2 * T * Hx * F + 2 * T * F * O,
        transcendentals=T * F,
        bytes_accessed=(4 * T * Hx + 2 * Hx * F + 4 * F + 2 * F * O + 4 * O + 4 * T * O),
    )
    # TODO(synk): at real model dims (v7x: 64 MiB VMEM) add an FFN_DIM-chunk reduction
    # axis LAST in the grid ("arbitrary") with a pl.when(k==0)-zeroed f32 VMEM
    # accumulator, single-buffer the constant-index weight blocks
    # (pipeline_mode=pl.Buffered(1)), and set vmem_limit_bytes so
    # 2*(w1_tile + w2_tile) bf16 + activation tile + f32 acc <= ~48 MiB.
    return pl.pallas_call(
        _ffn_kernel,
        grid=(T // tile_t,),
        in_specs=[
            pl.BlockSpec((tile_t, Hx), lambda i: (i, 0)),
            pl.BlockSpec((Hx, F), lambda i: (0, 0)),
            pl.BlockSpec((1, F), lambda i: (0, 0)),
            pl.BlockSpec((F, O), lambda i: (0, 0)),
            pl.BlockSpec((1, O), lambda i: (0, 0)),
        ],
        out_specs=pl.BlockSpec((tile_t, O), lambda i: (i, 0)),
        out_shape=jax.ShapeDtypeStruct((T, O), jnp.float32),
        compiler_params=pltpu.CompilerParams(dimension_semantics=("parallel",)),
        cost_estimate=cost,
    )(x, w1, b1.reshape(1, F), w2, b2.reshape(1, O))


def pallas_grouped_moe_ffn(tile_expert, tile_valid, xs, factor, w1, b1, w2, b2):
    """Routed expert FFN.

    xs is expert-sorted/tile-padded bf16 [P, H]; factor is the matching [P, 1] router
    probability.  tile_expert[t] / tile_valid[t] are scalar-prefetched into SMEM: the
    expert id selects the resident weight set inside the kernel and the valid count
    lets pure-padding tiles skip compute.
    """
    P, Hx = xs.shape
    E, _, F = w1.shape
    n_tiles = P // MOE_TILE_T
    cost = pl.CostEstimate(
        flops=2 * P * Hx * F + 2 * P * F * Hx,
        transcendentals=P * F,
        bytes_accessed=(2 * P * Hx + 4 * P
                        + E * (2 * Hx * F + 4 * F + 2 * F * Hx + 4 * Hx)
                        + 4 * P * Hx),
    )
    grid_spec = pltpu.PrefetchScalarGridSpec(
        num_scalar_prefetch=2,
        grid=(n_tiles,),
        in_specs=[
            pl.BlockSpec((MOE_TILE_T, Hx), lambda t, te, nv: (t, 0)),
            pl.BlockSpec((MOE_TILE_T, 1), lambda t, te, nv: (t, 0)),
            # All E expert weight sets stay resident in VMEM (constant index_map,
            # ~512 KiB bf16 total here) — no per-tile weight DMA.  Fall back to
            # per-tile te[t]-indexed blocks only when E x weights no longer fits VMEM.
            pl.BlockSpec((E, Hx, F), lambda t, te, nv: (0, 0, 0)),
            pl.BlockSpec((E, 1, F), lambda t, te, nv: (0, 0, 0)),
            pl.BlockSpec((E, F, Hx), lambda t, te, nv: (0, 0, 0)),
            pl.BlockSpec((E, 1, Hx), lambda t, te, nv: (0, 0, 0)),
        ],
        out_specs=pl.BlockSpec((MOE_TILE_T, Hx), lambda t, te, nv: (t, 0)),
    )
    return pl.pallas_call(
        _moe_ffn_kernel,
        grid_spec=grid_spec,
        out_shape=jax.ShapeDtypeStruct((P, Hx), jnp.float32),
        compiler_params=pltpu.CompilerParams(dimension_semantics=("parallel",)),
        cost_estimate=cost,
    )(tile_expert, tile_valid, xs, factor,
      w1, b1.reshape(E, 1, F), w2, b2.reshape(E, 1, Hx))


# ----------------------------- forward paths -----------------------------

def feedforward_forward(hidden_states, p):
    Bx, Sx, Hx = hidden_states.shape
    xf = hidden_states.reshape(Bx * Sx, Hx)   # stays f32; bf16 cast is in-kernel
    out = pallas_ffn(xf, p["w1"], p["b1"], p["w2"], p["b2"])
    return out.reshape(Bx, Sx, Hx)


def switch_ffn_forward(hidden_states, p):
    """Top-1 Switch MoE over N_SWITCH expert FFNs, no token dropping.

    The tiny router matmul/softmax/argmax and the sort/scatter routing tables run in
    plain XLA because their results are needed *before* the pallas_call; the expert
    FFN compute (including the router-probability scale) is a single routed Pallas
    kernel that touches each token only with its own expert's weights.
    """
    Bx, Sx, Hx = hidden_states.shape
    T = Bx * Sx
    E = N_SWITCH
    TILE = MOE_TILE_T
    xf = hidden_states.reshape(T, Hx)

    # ---- router (tiny [T, E]) ----
    logits = jnp.dot(xf, p["wr"]) + p["br"]
    probs = jax.nn.softmax(logits, axis=-1)
    route = jnp.argmax(probs, axis=-1).astype(jnp.int32)      # [T]
    factor = jnp.max(probs, axis=-1)                          # [T] winning prob

    # ---- expert-sorted, tile-aligned token layout (static shapes) ----
    n_tiles = (T + E * (TILE - 1) + TILE - 1) // TILE         # static upper bound
    P = n_tiles * TILE

    counts = jnp.sum(jax.nn.one_hot(route, E, dtype=jnp.int32), axis=0)          # [E]
    padded_counts = ((counts + TILE - 1) // TILE) * TILE                         # [E]
    group_start = jnp.concatenate(
        [jnp.zeros((1,), jnp.int32), jnp.cumsum(padded_counts)[:-1]])            # [E]
    cum_counts = jnp.concatenate(
        [jnp.zeros((1,), jnp.int32), jnp.cumsum(counts)[:-1]])                   # [E]

    order = jnp.argsort(route)                                # tokens grouped by expert
    route_sorted = route[order]
    pos_in_group = jnp.arange(T, dtype=jnp.int32) - cum_counts[route_sorted]
    dest = group_start[route_sorted] + pos_in_group           # [T] slot in padded layout

    gather_idx = jnp.zeros((P,), jnp.int32).at[dest].set(order.astype(jnp.int32))
    boundaries = jnp.cumsum(padded_counts)
    tile_start = jnp.arange(n_tiles, dtype=jnp.int32) * TILE
    tile_expert = jnp.minimum(
        jnp.searchsorted(boundaries, tile_start, side="right"), E - 1
    ).astype(jnp.int32)                                       # [n_tiles]
    group_end_valid = group_start + counts                    # [E]
    tile_valid = jnp.clip(
        group_end_valid[tile_expert] - tile_start, 0, TILE).astype(jnp.int32)    # [n_tiles]

    # cast once BEFORE the gather (halves gather HBM traffic), then gather into the
    # expert-contiguous padded layout; padded rows read token 0 but are never used.
    xb = xf.astype(jnp.bfloat16)
    xs = xb[gather_idx]                                       # [P, H] bf16
    factor_sorted = (
        jnp.zeros((P,), jnp.float32).at[dest].set(factor[order]).reshape(P, 1))  # [P, 1]

    ys = pallas_grouped_moe_ffn(tile_expert, tile_valid, xs, factor_sorted,
                                p["w1"], p["b1"], p["w2"], p["b2"])

    dest_of_token = jnp.zeros((T,), jnp.int32).at[order].set(dest)
    out = ys[dest_of_token]              # router-prob scale already applied in-kernel
    return out.reshape(Bx, Sx, Hx)


def expert_ffn_common_forward(params, hidden_states, *, common_ffn):
    """ExpertFFNCommon.forward: hidden_states [B,S,H] -> ffn_output [B,S,H]."""
    # TODO(synk): FeedForwardLoRA / SwitchFeedForwardLoRA config branches are not
    # modelled (their definitions are not in the provided source).
    if common_ffn:
        return feedforward_forward(hidden_states, params["ffn"])
    return switch_ffn_forward(hidden_states, params["moe"])


# ----------------------------- pure-JAX references (for self-check) -----------------------------

def feedforward_reference(hidden_states, p):
    Bx, Sx, Hx = hidden_states.shape
    xf = hidden_states.reshape(-1, Hx).astype(jnp.bfloat16)
    h = jnp.dot(xf, p["w1"], preferred_element_type=jnp.float32) + p["b1"]
    h = jax.nn.gelu(h)
    y = jnp.dot(h.astype(jnp.bfloat16), p["w2"], preferred_element_type=jnp.float32) + p["b2"]
    return y.reshape(Bx, Sx, Hx)


def switch_ffn_reference(hidden_states, p):
    Bx, Sx, Hx = hidden_states.shape
    xf = hidden_states.reshape(-1, Hx)
    T = xf.shape[0]
    logits = jnp.dot(xf, p["wr"]) + p["br"]
    probs = jax.nn.softmax(logits, axis=-1)
    route = jnp.argmax(probs, axis=-1)
    factor = jnp.max(probs, axis=-1)
    xb = xf.astype(jnp.bfloat16)
    outs = []
    for e in range(N_SWITCH):
        h = jnp.dot(xb, p["w1"][e], preferred_element_type=jnp.float32) + p["b1"][e]
        h = jax.nn.gelu(h)
        outs.append(
            jnp.dot(h.astype(jnp.bfloat16), p["w2"][e],
                    preferred_element_type=jnp.float32) + p["b2"][e])
    outs = jnp.stack(outs, axis=0)                       # [E, T, H]
    sel = outs[route, jnp.arange(T)]                     # [T, H]
    return (sel * factor[:, None]).reshape(Bx, Sx, Hx)


# ----------------------------- deterministic parameter init -----------------------------

def init_params(key):
    keys = iter(jax.random.split(key, 64))

    def w(shape, dtype=jnp.bfloat16):
        return (jax.random.normal(next(keys), shape, jnp.float32) * 0.02).astype(dtype)

    def b(shape):
        return jax.random.normal(next(keys), shape, jnp.float32) * 0.02

    ffn = dict(
        w1=w((H, FFN_DIM)), b1=b((FFN_DIM,)),
        w2=w((FFN_DIM, H)), b2=b((H,)),
    )
    moe = dict(
        wr=w((H, N_SWITCH), jnp.float32), br=b((N_SWITCH,)),
        w1=jnp.stack([w((H, FFN_DIM)) for _ in range(N_SWITCH)]),
        b1=jnp.stack([b((FFN_DIM,)) for _ in range(N_SWITCH)]),
        w2=jnp.stack([w((FFN_DIM, H)) for _ in range(N_SWITCH)]),
        b2=jnp.stack([b((H,)) for _ in range(N_SWITCH)]),
    )
    return dict(ffn=ffn, moe=moe)


# ----------------------------- main -----------------------------

if __name__ == "__main__":
    root = jax.random.PRNGKey(0)
    k_param, k_x = jax.random.split(root)
    params = init_params(k_param)

    hidden_states = jax.random.normal(k_x, (B, S, H), jnp.float32)

    fwd_common = jax.jit(functools.partial(expert_ffn_common_forward, common_ffn=True))
    fwd_moe = jax.jit(functools.partial(expert_ffn_common_forward, common_ffn=False))

    out_common = fwd_common(params, hidden_states)    # config.common_ffn = True path
    out_moe = fwd_moe(params, hidden_states)          # SwitchFeedForward path
    jax.block_until_ready((out_common, out_moe))

    assert out_common.shape == (B, S, H) and out_moe.shape == (B, S, H)
    assert jnp.all(jnp.isfinite(out_common)) and jnp.all(jnp.isfinite(out_moe))

    ref_common = feedforward_reference(hidden_states, params["ffn"])
    ref_moe = switch_ffn_reference(hidden_states, params["moe"])
    assert jnp.allclose(out_common, ref_common, atol=1e-2, rtol=1e-2)
    assert jnp.allclose(out_moe, ref_moe, atol=1e-2, rtol=1e-2)

    print("KERNEL_OK")
</pallas_src>

<mosaic_0001>
module attributes {stable_mosaic.version = 11 : i64} {
  func.func @_ffn_kernel(%arg0: i32, %arg1: memref<64x128xf32, #tpu.memory_space<vmem>>, %arg2: memref<128x256xbf16, #tpu.memory_space<vmem>>, %arg3: memref<1x256xf32, #tpu.memory_space<vmem>>, %arg4: memref<256x128xbf16, #tpu.memory_space<vmem>>, %arg5: memref<1x128xf32, #tpu.memory_space<vmem>>, %arg6: memref<64x128xf32, #tpu.memory_space<vmem>>) attributes {dimension_semantics = [#tpu.dimension_semantics<parallel>], iteration_bounds = array<i64: 2>, scalar_prefetch = 0 : i64, scratch_operands = 0 : i64, tpu.core_type = #tpu.core_type<tc>, window_params = [{transform_indices = @transform_0, window_bounds = array<i64: 64, 128>}, {pipeline_mode = #tpu.pipeline_mode<synchronous>, transform_indices = @transform_1, window_bounds = array<i64: 128, 256>}, {pipeline_mode = #tpu.pipeline_mode<synchronous>, transform_indices = @transform_2, window_bounds = array<i64: 1, 256>}, {pipeline_mode = #tpu.pipeline_mode<synchronous>, transform_indices = @transform_3, window_bounds = array<i64: 256, 128>}, {pipeline_mode = #tpu.pipeline_mode<synchronous>, transform_indices = @transform_4, window_bounds = array<i64: 1, 128>}, {transform_indices = @transform_5, window_bounds = array<i64: 64, 128>}]} {
    %c0 = arith.constant 0 : index
    %c0_0 = arith.constant 0 : index
    %0 = vector.load %arg1[%c0, %c0_0] : memref<64x128xf32, #tpu.memory_space<vmem>>, vector<64x128xf32>
    %1 = arith.truncf %0 : vector<64x128xf32> to vector<64x128xbf16>
    %c0_1 = arith.constant 0 : index
    %c0_2 = arith.constant 0 : index
    %2 = vector.load %arg2[%c0_1, %c0_2] : memref<128x256xbf16, #tpu.memory_space<vmem>>, vector<128x256xbf16>
    %cst = arith.constant dense<0.000000e+00> : vector<64x256xf32>
    %3 = tpu.matmul %1, %2, %cst {dimension_numbers = #tpu.dot_dimension_numbers<[1], [0], [0], [1], [0, 0, 1, 1], [], []>} : vector<64x128xbf16>, vector<128x256xbf16>, vector<64x256xf32> -> vector<64x256xf32>
    %c0_3 = arith.constant 0 : index
    %c0_4 = arith.constant 0 : index
    %4 = vector.load %arg3[%c0_3, %c0_4] : memref<1x256xf32, #tpu.memory_space<vmem>>, vector<1x256xf32>
    %5 = vector.broadcast %4 : vector<1x256xf32> to vector<64x256xf32>
    %6 = arith.addf %3, %5 : vector<64x256xf32>
    %7 = arith.mulf %6, %6 : vector<64x256xf32>
    %8 = arith.mulf %6, %7 : vector<64x256xf32>
    %cst_5 = arith.constant 4.471500e-02 : f32
    %9 = vector.broadcast %cst_5 : f32 to vector<64x256xf32>
    %10 = arith.mulf %9, %8 : vector<64x256xf32>
    %11 = arith.addf %6, %10 : vector<64x256xf32>
    %cst_6 = arith.constant 0.797884583 : f32
    %12 = vector.broadcast %cst_6 : f32 to vector<64x256xf32>
    %13 = arith.mulf %12, %11 : vector<64x256xf32>
    %14 = math.tanh %13 : vector<64x256xf32>
    %cst_7 = arith.constant 1.000000e+00 : f32
    %15 = vector.broadcast %cst_7 : f32 to vector<64x256xf32>
    %16 = arith.addf %15, %14 : vector<64x256xf32>
    %cst_8 = arith.constant 5.000000e-01 : f32
    %17 = vector.broadcast %cst_8 : f32 to vector<64x256xf32>
    %18 = arith.mulf %17, %16 : vector<64x256xf32>
    %19 = arith.mulf %6, %18 : vector<64x256xf32>
    %20 = arith.truncf %19 : vector<64x256xf32> to vector<64x256xbf16>
    %c0_9 = arith.constant 0 : index
    %c0_10 = arith.constant 0 : index
    %21 = vector.load %arg4[%c0_9, %c0_10] : memref<256x128xbf16, #tpu.memory_space<vmem>>, vector<256x128xbf16>
    %cst_11 = arith.constant dense<0.000000e+00> : vector<64x128xf32>
    %22 = tpu.matmul %20, %21, %cst_11 {dimension_numbers = #tpu.dot_dimension_numbers<[1], [0], [0], [1], [0, 0, 1, 1], [], []>} : vector<64x256xbf16>, vector<256x128xbf16>, vector<64x128xf32> -> vector<64x128xf32>
    %c0_12 = arith.constant 0 : index
    %c0_13 = arith.constant 0 : index
    %23 = vector.load %arg5[%c0_12, %c0_13] : memref<1x128xf32, #tpu.memory_space<vmem>>, vector<1x128xf32>
    %24 = vector.broadcast %23 : vector<1x128xf32> to vector<64x128xf32>
    %25 = arith.addf %22, %24 : vector<64x128xf32>
    %c0_14 = arith.constant 0 : index
    %c0_15 = arith.constant 0 : index
    %26 = vector.load %arg6[%c0_14, %c0_15] : memref<64x128xf32, #tpu.memory_space<vmem>>, vector<64x128xf32>
    tpu.vector_store %arg6[%c0_14, %c0_15], %25 {strides = array<i32>} : memref<64x128xf32, #tpu.memory_space<vmem>>, vector<64x128xf32>,
    return
  }
  func.func @transform_0(%arg0: i32) -> (i32, i32) {
    %c0_i32 = arith.constant 0 : i32
    %c0_i32_0 = arith.constant 0 : i32
    return %arg0, %c0_i32 : i32, i32
  }
  func.func @transform_1(%arg0: i32) -> (i32, i32) {
    %c0_i32 = arith.constant 0 : i32
    %c0_i32_0 = arith.constant 0 : i32
    %c0_i32_1 = arith.constant 0 : i32
    return %c0_i32, %c0_i32_0 : i32, i32
  }
  func.func @transform_2(%arg0: i32) -> (i32, i32) {
    %c0_i32 = arith.constant 0 : i32
    %c0_i32_0 = arith.constant 0 : i32
    %c0_i32_1 = arith.constant 0 : i32
    return %c0_i32, %c0_i32_0 : i32, i32
  }
  func.func @transform_3(%arg0: i32) -> (i32, i32) {
    %c0_i32 = arith.constant 0 : i32
    %c0_i32_0 = arith.constant 0 : i32
    %c0_i32_1 = arith.constant 0 : i32
    return %c0_i32, %c0_i32_0 : i32, i32
  }
  func.func @transform_4(%arg0: i32) -> (i32, i32) {
    %c0_i32 = arith.constant 0 : i32
    %c0_i32_0 = arith.constant 0 : i32
    %c0_i32_1 = arith.constant 0 : i32
    return %c0_i32, %c0_i32_0 : i32, i32
  }
  func.func @transform_5(%arg0: i32) -> (i32, i32) {
    %c0_i32 = arith.constant 0 : i32
    %c0_i32_0 = arith.constant 0 : i32
    return %arg0, %c0_i32 : i32, i32
  }
}

</mosaic_0001>

<llo_original>
// kernel: expert_ffn_common_forward.1
$region0: #{expert_ffn_common_forward.1}
  #allocation0 [shape = 'u32[]', space=smem, size = 0x4, offset = 0x4, fixed_abs, tag = 'smem constant byte address 0x4 - core index']
  #allocation1 [shape = 'u32[144,128]{1,0:T(1,128)}', space=vmem, size = 0x12000, scoped, tag = 'internal scratch']
  %s0 = inlined_call_operand.hbm [shape: f32[128,128], index: 0, kind: input, shape index: {}]
  %s1 = inlined_call_operand.hbm [shape: bf16[128,256], index: 1, kind: input, shape index: {}]
  %s2 = inlined_call_operand.vmem [shape: f32[1,256], index: 2, kind: input, shape index: {}]
  %s3 = inlined_call_operand.hbm [shape: bf16[256,128], index: 3, kind: input, shape index: {}]
  %s4 = inlined_call_operand.vmem [shape: f32[1,128], index: 4, kind: input, shape index: {}]
  %s5 = inlined_call_operand.hbm [shape: f32[128,128], index: 5, kind: output, shape index: {}]
  %s6 = sld [smem:[#allocation0]]
  $region65: #{expert_ffn_common_forward.1} parent=0
    _
  %s8 = ssub.s32 1, %s6
  %s9 = scalar_select 0, %s8, %s6
  $region1: #{expert_ffn_common_forward.1} parent=0
    #allocation2 [shape = 'u8[65536]{0}', space=vmem, size = 0x10000, scoped, tag = 'input window, operand 0']
    #allocation3 [shape = 's32[2]{0}', space=sflag, size = 0x8, scoped, tag = 'scoped memory for expert_ffn_common_forward.1']
    #allocation4 [shape = 's32[2]{0}', space=sflag, size = 0x8, scoped, tag = 'scoped memory for expert_ffn_common_forward.1']
    #allocation5 [shape = 'u8[65536]{0}', space=vmem, size = 0x10000, scoped, tag = 'input window, operand 1, single buffered']
    #allocation6 [shape = 's32[1]{0}', space=sflag, size = 0x4, scoped, tag = 'scoped memory for expert_ffn_common_forward.1']
    #allocation7 [shape = 'u8[65536]{0}', space=vmem, size = 0x10000, scoped, tag = 'input window, operand 3, single buffered']
    #allocation8 [shape = 'u8[65536]{0}', space=vmem, size = 0x10000, scoped, tag = 'output window, operand 0']
    %10 = vsyncpa [#allocation3], 0
    %s11 = scalar_lea.sflag [#allocation3], 1
    %12 = vsyncpa %s11, 0
    %13 = vsyncpa [#allocation6], 0
    %14 = vsyncpa [#allocation4], 0
    %s15 = scalar_lea.sflag [#allocation4], 1
    %16 = vsyncpa %s15, 0
    loop: start=0, step=1, limit=4
    $region2: #{expert_ffn_common_forward.1} parent=1 // loop_pre_header
      _
    $region3: #{expert_ffn_common_forward.1} parent=1 // loop_header
      %s18 = sphi 0, %s22
      %p19 = scmp.ge.s32.totalorder %s18, 4
      %s28 = sphi 0, %s30
      %s31 = sphi 0, %s28
      %s32 = sphi 0, %s31
      %s48 = sphi 0, %s32
      %s52 = sphi 0, %s52
      %s54 = sphi 0, %s52
      %s55 = sphi 0, %s54
      %s69 = sphi 0, %s55
      %s73 = sphi 0, %s73
      %s75 = sphi 0, %s73
      %s76 = sphi 0, %s75
      %s90 = sphi 0, %s76
      %s94 = sphi 0, %s94
      %s96 = sphi 0, %s94
      %s97 = sphi 0, %s96
      %s111 = sphi 0, %s97
      %s115 = sphi 0, %s115
      %s117 = sphi 0, %s115
      %s118 = sphi 0, %s117
      %s132 = sphi 0, %s118
      %s138 = sphi 0, %s140
      %s141 = sphi 0, %s138
      %s142 = sphi 0, %s141
      %s158 = sphi 0, %s142
    $region4: #{expert_ffn_common_forward.1} parent=1 // loop_header_branch
      %21 = sbr.rel (%p19) target = $region8
    $region5: #{expert_ffn_common_forward.1} parent=1 // loop_body
      %s23 = ssub.s32 %s18, 1
      %s24 = ssub.s32 %s18, 2
      %s25 = sadd.s32 %s18, 1
      %s26 = ssub.s32 %s18, %s25
      %p27 = scmp.eq.s32.totalorder %s26, 0
      %s29 = sadd.s32 %s28, 1
      %s30 = scalar_select %p27, %s28, %s29
      %p33 = pneg %p27
      %p34 = scmp.eq.s32.totalorder %s18, 1
      %p35 = por %p33, %p34
      %p36 = scmp.ne.s32.totalorder %s28, %s31
      %p37 = scmp.eq.s32.totalorder %s18, 0
      %p38 = por %p36, %p37
      %p39 = scmp.ne.s32.totalorder %s28, %s31
      %p40 = scmp.eq.s32.totalorder %s23, 1
      %p41 = por %p39, %p40
      %p42 = scmp.ne.s32.totalorder %s31, %s32
      %p43 = scmp.eq.s32.totalorder %s23, 0
      %p44 = por %p42, %p43
      %p45 = scmp.ne.s32.totalorder %s31, %s32
      %p46 = scmp.eq.s32.totalorder %s24, 1
      %p47 = por %p45, %p46
      %p49 = scmp.ne.s32.totalorder %s32, %s48
      %p50 = scmp.eq.s32.totalorder %s24, 0
      %p51 = por %p49, %p50
      %s53 = sadd.s32 %s52, 1
      %p56 = scmp.eq.s32.totalorder %s18, 1
      %p57 = scmp.ne.s32.totalorder %s52, %s54
      %p58 = scmp.eq.s32.totalorder %s18, 0
      %p59 = por %p57, %p58
      %p60 = scmp.ne.s32.totalorder %s52, %s54
      %p61 = scmp.eq.s32.totalorder %s23, 1
      %p62 = por %p60, %p61
      %p63 = scmp.ne.s32.totalorder %s54, %s55
      %p64 = scmp.eq.s32.totalorder %s23, 0
      %p65 = por %p63, %p64
      %p66 = scmp.ne.s32.totalorder %s54, %s55
      %p67 = scmp.eq.s32.totalorder %s24, 1
      %p68 = por %p66, %p67
      %p70 = scmp.ne.s32.totalorder %s55, %s69
      %p71 = scmp.eq.s32.totalorder %s24, 0
      %p72 = por %p70, %p71
      %s74 = sadd.s32 %s73, 1
      %p77 = scmp.eq.s32.totalorder %s18, 1
      %p78 = scmp.ne.s32.totalorder %s73, %s75
      %p79 = scmp.eq.s32.totalorder %s18, 0
      %p80 = por %p78, %p79
      %p81 = scmp.ne.s32.totalorder %s73, %s75
      %p82 = scmp.eq.s32.totalorder %s23, 1
      %p83 = por %p81, %p82
      %p84 = scmp.ne.s32.totalorder %s75, %s76
      %p85 = scmp.eq.s32.totalorder %s23, 0
      %p86 = por %p84, %p85
      %p87 = scmp.ne.s32.totalorder %s75, %s76
      %p88 = scmp.eq.s32.totalorder %s24, 1
      %p89 = por %p87, %p88
      %p91 = scmp.ne.s32.totalorder %s76, %s90
      %p92 = scmp.eq.s32.totalorder %s24, 0
      %p93 = por %p91, %p92
      %s95 = sadd.s32 %s94, 1
      %p98 = scmp.eq.s32.totalorder %s18, 1
      %p99 = scmp.ne.s32.totalorder %s94, %s96
      %p100 = scmp.eq.s32.totalorder %s18, 0
      %p101 = por %p99, %p100
      %p102 = scmp.ne.s32.totalorder %s94, %s96
      %p103 = scmp.eq.s32.totalorder %s23, 1
      %p104 = por %p102, %p103
      %p105 = scmp.ne.s32.totalorder %s96, %s97
      %p106 = scmp.eq.s32.totalorder %s23, 0
      %p107 = por %p105, %p106
      %p108 = scmp.ne.s32.totalorder %s96, %s97
      %p109 = scmp.eq.s32.totalorder %s24, 1
      %p110 = por %p108, %p109
      %p112 = scmp.ne.s32.totalorder %s97, %s111
      %p113 = scmp.eq.s32.totalorder %s24, 0
      %p114 = por %p112, %p113
      %s116 = sadd.s32 %s115, 1
      %p119 = scmp.eq.s32.totalorder %s18, 1
      %p120 = scmp.ne.s32.totalorder %s115, %s117
      %p121 = scmp.eq.s32.totalorder %s18, 0
      %p122 = por %p120, %p121
      %p123 = scmp.ne.s32.totalorder %s115, %s117
      %p124 = scmp.eq.s32.totalorder %s23, 1
      %p125 = por %p123, %p124
      %p126 = scmp.ne.s32.totalorder %s117, %s118
      %p127 = scmp.eq.s32.totalorder %s23, 0
      %p128 = por %p126, %p127
      %p129 = scmp.ne.s32.totalorder %s117, %s118
      %p130 = scmp.eq.s32.totalorder %s24, 1
      %p131 = por %p129, %p130
      %p133 = scmp.ne.s32.totalorder %s118, %s132
      %p134 = scmp.eq.s32.totalorder %s24, 0
      %p135 = por %p133, %p134
      %s136 = ssub.s32 %s18, %s25
      %p137 = scmp.eq.s32.totalorder %s136, 0
      %s139 = sadd.s32 %s138, 1
      %s140 = scalar_select %p137, %s138, %s139
      %p143 = pneg %p137
      %p144 = scmp.eq.s32.totalorder %s18, 1
      %p145 = por %p143, %p144
      %p146 = scmp.ne.s32.totalorder %s138, %s141
      %p147 = scmp.eq.s32.totalorder %s18, 0
      %p148 = por %p146, %p147
      %p149 = scmp.ne.s32.totalorder %s138, %s141
      %p150 = scmp.eq.s32.totalorder %s23, 1
      %p151 = por %p149, %p150
      %p152 = scmp.ne.s32.totalorder %s141, %s142
      %p153 = scmp.eq.s32.totalorder %s23, 0
      %p154 = por %p152, %p153
      %p155 = scmp.ne.s32.totalorder %s141, %s142
      %p156 = scmp.eq.s32.totalorder %s24, 1
      %p157 = por %p155, %p156
      %p159 = scmp.ne.s32.totalorder %s142, %s158
      %p160 = scmp.eq.s32.totalorder %s24, 0
      %p161 = por %p159, %p160
      %p162 = scmp.le.s32.totalorder 1, %s18
      %p163 = scmp.lt.s32.totalorder %s18, 3
      %p164 = pnand %p162, %p163
      %p165 = pneg %p164
      // Predicated region
      $region9: #{expert_ffn_common_forward.1} parent=5 // pred_check
        _
      $region10: #{expert_ffn_common_forward.1} parent=5 // pred_check_branch
        %167 = sbr.rel (%p164) target = $region12
      $region11: #{expert_ffn_common_forward.1} parent=5 // pred_region
        %s168 = ssub.s32 %s18, 1
        // Predicated region
        $region13: #{expert_ffn_common_forward.1} parent=11 // pred_check
          %p169 = pneg %p65
        $region14: #{expert_ffn_common_forward.1} parent=11 // pred_check_branch
          %171 = sbr.rel (%p169) target = $region16
        $region15: #{expert_ffn_common_forward.1} parent=11 // pred_region
          %s173 = ssub.s32 2048, 2048
          %174 = vsyncadd [#allocation6], %s173
          %s175 = sshll.u32 [#allocation5], 4
          %s176 = int_to_ptr.vmem [resolvable:$true] %s175
          %181 = dma.hbm_to_vmem [thread:$0]  %s1, 2048, %s176, [#allocation6], 128, 128, 8
        $region16: #{expert_ffn_common_forward.1} parent=11 // pred_fallthru
          _
        // Predicated region
        $region17: #{expert_ffn_common_forward.1} parent=11 // pred_check
          %p182 = pneg %p86
        $region18: #{expert_ffn_common_forward.1} parent=11 // pred_check_branch
          %184 = sbr.rel (%p182) target = $region20
        $region19: #{expert_ffn_common_forward.1} parent=11 // pred_region
          _
        $region20: #{expert_ffn_common_forward.1} parent=11 // pred_fallthru
          _
        // Predicated region
        $region21: #{expert_ffn_common_forward.1} parent=11 // pred_check
          %p185 = pneg %p107
        $region22: #{expert_ffn_common_forward.1} parent=11 // pred_check_branch
          %187 = sbr.rel (%p185) target = $region24
        $region23: #{expert_ffn_common_forward.1} parent=11 // pred_region
          %s189 = ssub.s32 2048, 2048
          %190 = vsyncadd [#allocation6], %s189
          %s191 = sshll.u32 [#allocation7], 4
          %s192 = int_to_ptr.vmem [resolvable:$true] %s191
          %197 = dma.hbm_to_vmem [thread:$0]  %s3, 2048, %s192, [#allocation6], 64, 64, 4
        $region24: #{expert_ffn_common_forward.1} parent=11 // pred_fallthru
          _
        // Predicated region
        $region25: #{expert_ffn_common_forward.1} parent=11 // pred_check
          %p198 = pneg %p128
        $region26: #{expert_ffn_common_forward.1} parent=11 // pred_check_branch
          %200 = sbr.rel (%p198) target = $region28
        $region27: #{expert_ffn_common_forward.1} parent=11 // pred_region
          _
        $region28: #{expert_ffn_common_forward.1} parent=11 // pred_fallthru
          _
      $region12: #{expert_ffn_common_forward.1} parent=5 // pred_fallthru
        _
      %p201 = scmp.lt.s32.totalorder %s18, 2
      // Predicated region
      $region29: #{expert_ffn_common_forward.1} parent=5 // pred_check
        %p202 = pneg %p201
      $region30: #{expert_ffn_common_forward.1} parent=5 // pred_check_branch
        %204 = sbr.rel (%p202) target = $region32
      $region31: #{expert_ffn_common_forward.1} parent=5 // pred_region
        // Predicated region
        $region33: #{expert_ffn_common_forward.1} parent=31 // pred_check
          %p205 = pneg %p38
        $region34: #{expert_ffn_common_forward.1} parent=31 // pred_check_branch
          %207 = sbr.rel (%p205) target = $region36
        $region35: #{expert_ffn_common_forward.1} parent=31 // pred_region
          %s208 = sand.u32 %s28, 1
          %s209 = scalar_lea.sflag [#allocation3], %s208
          %s210 = sand.u32 %s28, 1
          %s211 = smul.addr %s210, 64
          %s212 = scalar_lea.vmem [#allocation2], %s211
          %s213 = smul.u32 8, %s18
          %s215 = ssub.s32 1024, 1024
          %216 = vsyncadd %s209, %s215
          %s217 = smul.addr %s213, 128
          %s218 = scalar_lea.hbm %s0, %s217
          %s219 = sshll.u32 %s212, 4
          %s220 = int_to_ptr.vmem [resolvable:$true] %s219
          %225 = dma.hbm_to_vmem [thread:$0]  %s218, 1024, %s220, %s209, 128, 128, 8
        $region36: #{expert_ffn_common_forward.1} parent=31 // pred_fallthru
          _
      $region32: #{expert_ffn_common_forward.1} parent=5 // pred_fallthru
        _
      %p226 = scmp.le.s32.totalorder 1, %s18
      %p227 = scmp.lt.s32.totalorder %s18, 3
      %p228 = pnand %p226, %p227
      %p229 = pneg %p228
      // Predicated region
      $region37: #{expert_ffn_common_forward.1} parent=5 // pred_check
        _
      $region38: #{expert_ffn_common_forward.1} parent=5 // pred_check_branch
        %231 = sbr.rel (%p228) target = $region40
      $region39: #{expert_ffn_common_forward.1} parent=5 // pred_region
        %s232 = ssub.s32 %s18, 1
        %s233 = sand.u32 %s31, 1
        %s234 = scalar_lea.sflag [#allocation3], %s233
        %s235 = sand.u32 %s31, 1
        %s236 = smul.addr %s235, 64
        %s237 = scalar_lea.vmem [#allocation2], %s236
        // Predicated region
        $region41: #{expert_ffn_common_forward.1} parent=39 // pred_check
          %p238 = pneg %p44
        $region42: #{expert_ffn_common_forward.1} parent=39 // pred_check_branch
          %240 = sbr.rel (%p238) target = $region44
        $region43: #{expert_ffn_common_forward.1} parent=39 // pred_region
          %241 = dma.done %s234, 1024
        $region44: #{expert_ffn_common_forward.1} parent=39 // pred_fallthru
          _
        // Predicated region
        $region45: #{expert_ffn_common_forward.1} parent=39 // pred_check
          %p242 = pneg %p65
        $region46: #{expert_ffn_common_forward.1} parent=39 // pred_check_branch
          %244 = sbr.rel (%p242) target = $region48
        $region47: #{expert_ffn_common_forward.1} parent=39 // pred_region
          %245 = dma.done [#allocation6], 2048
        $region48: #{expert_ffn_common_forward.1} parent=39 // pred_fallthru
          _
        // Predicated region
        $region49: #{expert_ffn_common_forward.1} parent=39 // pred_check
          %p246 = pneg %p107
        $region50: #{expert_ffn_common_forward.1} parent=39 // pred_check_branch
          %248 = sbr.rel (%p246) target = $region52
        $region51: #{expert_ffn_common_forward.1} parent=39 // pred_region
          %249 = dma.done [#allocation6], 2048
        $region52: #{expert_ffn_common_forward.1} parent=39 // pred_fallthru
          _
        %s250 = sand.u32 %s31, 1
        %s251 = scalar_lea.sflag [#allocation3], %s250
        %s252 = sand.u32 %s31, 1
        %s253 = smul.addr %s252, 64
        %s254 = scalar_lea.vmem [#allocation2], %s253
        %p255 = pneg %p44
        %p256 = pneg %p41
        %p257 = pneg %p65
        %p258 = pneg %p62
        %p259 = pneg %p86
        %p260 = pneg %p83
        %p261 = pneg %p107
        %p262 = pneg %p104
        %p263 = pneg %p128
        %p264 = pneg %p125
        %p265 = pneg %p154
        %p266 = pneg %p151
        %s267 = sand.u32 %s141, 1
        %s268 = scalar_lea.sflag [#allocation4], %s267
        %s269 = sand.u32 %s141, 1
        %s270 = smul.addr %s269, 64
        %s271 = scalar_lea.vmem [#allocation8], %s270
        %s272 = smul.u32 8, %s23
        %s273 = smul.u32 8, %s23
        %v275 = vld [vmem:[%s237] sm:$0xff]
        %v276 = vld [vmem:[%s237 + $0x8] sm:$0xff]
        %v277 = vld [vmem:[%s237 + $0x10] sm:$0xff]
        %v278 = vld [vmem:[%s237 + $0x18] sm:$0xff]
        %v279 = vld [vmem:[%s237 + $0x20] sm:$0xff]
        %v280 = vld [vmem:[%s237 + $0x28] sm:$0xff]
        %v281 = vld [vmem:[%s237 + $0x30] sm:$0xff]
        %v282 = vld [vmem:[%s237 + $0x38] sm:$0xff]
        %v283 = vpack.c.bf16 %v276, %v275
        %v284 = vpack.c.bf16 %v278, %v277
        %v285 = vpack.c.bf16 %v280, %v279
        %v286 = vpack.c.bf16 %v282, %v281
        %v287 = vld [vmem:[#allocation5] sm:$0xff]
        %v288 = vld [vmem:[#allocation5 + $0x8] sm:$0xff]
        %v289 = vld [vmem:[#allocation5 + $0x10] sm:$0xff]
        %v290 = vld [vmem:[#allocation5 + $0x18] sm:$0xff]
        %v291 = vld [vmem:[#allocation5 + $0x20] sm:$0xff]
        %v292 = vld [vmem:[#allocation5 + $0x28] sm:$0xff]
        %v293 = vld [vmem:[#allocation5 + $0x30] sm:$0xff]
        %v294 = vld [vmem:[#allocation5 + $0x38] sm:$0xff]
        %v295 = vld [vmem:[#allocation5 + $0x40] sm:$0xff]
        %v296 = vld [vmem:[#allocation5 + $0x48] sm:$0xff]
        %v297 = vld [vmem:[#allocation5 + $0x50] sm:$0xff]
        %v298 = vld [vmem:[#allocation5 + $0x58] sm:$0xff]
        %v299 = vld [vmem:[#allocation5 + $0x60] sm:$0xff]
        %v300 = vld [vmem:[#allocation5 + $0x68] sm:$0xff]
        %v301 = vld [vmem:[#allocation5 + $0x70] sm:$0xff]
        %v302 = vld [vmem:[#allocation5 + $0x78] sm:$0xff]
        %v303 = vld [vmem:[%s2] sm:$0x3]
        %v305 = vlaneseq
        %v306 = vshrl.u32 %v305, 7
        %v307 = vsub.s32 0, %v306
        %v308 = vrot.slane %v303, %v307
        %v309 = vlaneseq
        %v310 = vshrl.u32 %v309, 7
        %v311 = vsub.s32 1, %v310
        %v312 = vrot.slane %v303, %v311
        %v331 = vunpack.c.l.b16 %v287
        %v332 = vunpack.c.h.b16 %v287
        %v333 = vunpack.c.l.b16 %v288
        %v334 = vunpack.c.h.b16 %v288
        %v335 = vunpack.c.l.b16 %v289
        %v336 = vunpack.c.h.b16 %v289
        %v337 = vunpack.c.l.b16 %v290
        %v338 = vunpack.c.h.b16 %v290
        %v339 = vunpack.c.l.b16 %v291
        %v340 = vunpack.c.h.b16 %v291
        %v341 = vunpack.c.l.b16 %v292
        %v342 = vunpack.c.h.b16 %v292
        %v343 = vunpack.c.l.b16 %v293
        %v344 = vunpack.c.h.b16 %v293
        %v345 = vunpack.c.l.b16 %v294
        %v346 = vunpack.c.h.b16 %v294
        %v347 = vunpack.c.l.b16 %v295
        %v348 = vunpack.c.h.b16 %v295
        %v349 = vunpack.c.l.b16 %v296
        %v350 = vunpack.c.h.b16 %v296
        %v351 = vunpack.c.l.b16 %v297
        %v352 = vunpack.c.h.b16 %v297
        %v353 = vunpack.c.l.b16 %v298
        %v354 = vunpack.c.h.b16 %v298
        %v355 = vunpack.c.l.b16 %v299
        %v356 = vunpack.c.h.b16 %v299
        %v357 = vunpack.c.l.b16 %v300
        %v358 = vunpack.c.h.b16 %v300
        %v359 = vunpack.c.l.b16 %v301
        %v360 = vunpack.c.h.b16 %v301
        %v361 = vunpack.c.l.b16 %v302
        %v362 = vunpack.c.h.b16 %v302
        %v363 = vpack.c.b16 %v333, %v331
        %v364 = vpack.c.b16 %v334, %v332
        %v365 = vpack.c.b16 %v337, %v335
        %v366 = vpack.c.b16 %v338, %v336
        %v367 = vpack.c.b16 %v341, %v339
        %v368 = vpack.c.b16 %v342, %v340
        %v369 = vpack.c.b16 %v345, %v343
        %v370 = vpack.c.b16 %v346, %v344
        %v371 = vpack.c.b16 %v349, %v347
        %v372 = vpack.c.b16 %v350, %v348
        %v373 = vpack.c.b16 %v353, %v351
        %v374 = vpack.c.b16 %v354, %v352
        %v375 = vpack.c.b16 %v357, %v355
        %v376 = vpack.c.b16 %v358, %v356
        %v377 = vpack.c.b16 %v361, %v359
        %v378 = vpack.c.b16 %v362, %v360
        %395 = vmatprep.subr.bf16.mxu0 %v364
        %396 = vmatpush1.bf16.msra.mxu0 %v363
        %397 = vmatprep.subr.bf16.mxu0 %v366
        %398 = vmatpush1.bf16.msra.mxu0 %v365
        %399 = vmatprep.subr.bf16.mxu0 %v368
        %400 = vmatpush1.bf16.msra.mxu0 %v367
        %401 = vmatprep.subr.bf16.mxu0 %v370
        %402 = vmatpush1.bf16.msra.mxu0 %v369
        %403 = vmatprep.subr.bf16.mxu0 %v372
        %404 = vmatpush1.bf16.msra.mxu0 %v371
        %405 = vmatprep.subr.bf16.mxu0 %v374
        %406 = vmatpush1.bf16.msra.mxu0 %v373
        %407 = vmatprep.subr.bf16.mxu0 %v376
        %408 = vmatpush1.bf16.msra.mxu0 %v375
        %409 = vmatprep.subr.bf16.mxu0 %v378
        %410 = vmatpush1.bf16.msra.mxu0 %v377
        %411 = vmatprep.subr.bf16.mxu0 0
        %412 = vmatpush1.bf16.msra.mxu0 0
        %413 = vmatprep.subr.bf16.mxu0 0
        %414 = vmatpush1.bf16.msra.mxu0 0
        %415 = vmatprep.subr.bf16.mxu0 0
        %416 = vmatpush1.bf16.msra.mxu0 0
        %417 = vmatprep.subr.bf16.mxu0 0
        %418 = vmatpush1.bf16.msra.mxu0 0
        %419 = vmatprep.subr.bf16.mxu0 0
        %420 = vmatpush1.bf16.msra.mxu0 0
        %421 = vmatprep.subr.bf16.mxu0 0
        %422 = vmatpush1.bf16.msra.mxu0 0
        %423 = vmatprep.subr.bf16.mxu0 0
        %424 = vmatpush1.bf16.msra.mxu0 0
        %425 = vmatprep.subr.bf16.mxu0 0
        %426 = vmatpush1.bf16.msra.mxu0 0
        %427 = vmatprep.mubr.bf16.mxu0 0
        %428 = vmatmul.mubr.bf16.gmra.mrb[0].mxu0 %v283
        %v429 = vpop.f32.mrb[0].mxu0
        %v430 = vadd.f32 %v308, %v429
        %v431 = vpop.f32.mrb[0].mxu0
        %v432 = vadd.f32 %v312, %v431
        %v433 = vpop.f32.mrb[0].mxu0
        %v434 = vadd.f32 %v308, %v433
        %v435 = vpop.f32.mrb[0].mxu0
        %v436 = vadd.f32 %v312, %v435
        %437 = vmatprep.mubr.bf16.mxu0 0
        %438 = vmatmul.mubr.bf16.gmra.mrb[0].mxu0 %v284
        %v439 = vpop.f32.mrb[0].mxu0
        %v440 = vadd.f32 %v308, %v439
        %v441 = vpop.f32.mrb[0].mxu0
        %v442 = vadd.f32 %v312, %v441
        %v443 = vpop.f32.mrb[0].mxu0
        %v444 = vadd.f32 %v308, %v443
        %v445 = vpop.f32.mrb[0].mxu0
        %v446 = vadd.f32 %v312, %v445
        %447 = vmatprep.mubr.bf16.mxu0 0
        %448 = vmatmul.mubr.bf16.gmra.mrb[0].mxu0 %v285
        %v449 = vpop.f32.mrb[0].mxu0
        %v450 = vadd.f32 %v308, %v449
        %v451 = vpop.f32.mrb[0].mxu0
        %v452 = vadd.f32 %v312, %v451
        %v453 = vpop.f32.mrb[0].mxu0
        %v454 = vadd.f32 %v308, %v453
        %v455 = vpop.f32.mrb[0].mxu0
        %v456 = vadd.f32 %v312, %v455
        %457 = vmatprep.mubr.bf16.mxu0 0
        %458 = vmatmul.mubr.bf16.gmra.mrb[0].mxu0 %v286
        %v459 = vpop.f32.mrb[0].mxu0
        %v460 = vadd.f32 %v308, %v459
        %v461 = vpop.f32.mrb[0].mxu0
        %v462 = vadd.f32 %v312, %v461
        %v463 = vpop.f32.mrb[0].mxu0
        %v464 = vadd.f32 %v308, %v463
        %v465 = vpop.f32.mrb[0].mxu0
        %v466 = vadd.f32 %v312, %v465
        %467 = vdwg.mxu0
        %v468 = vmul.f32 %v430, %v430
        %v469 = vmul.f32 %v432, %v432
        %v470 = vmul.f32 %v434, %v434
        %v471 = vmul.f32 %v436, %v436
        %v472 = vmul.f32 %v440, %v440
        %v473 = vmul.f32 %v442, %v442
        %v474 = vmul.f32 %v444, %v444
        %v475 = vmul.f32 %v446, %v446
        %v476 = vmul.f32 %v450, %v450
        %v477 = vmul.f32 %v452, %v452
        %v478 = vmul.f32 %v454, %v454
        %v479 = vmul.f32 %v456, %v456
        %v480 = vmul.f32 %v460, %v460
        %v481 = vmul.f32 %v462, %v462
        %v482 = vmul.f32 %v464, %v464
        %v483 = vmul.f32 %v466, %v466
        %v484 = vmul.f32 %v430, %v468
        %v485 = vmul.f32 %v432, %v469
        %v486 = vmul.f32 %v434, %v470
        %v487 = vmul.f32 %v436, %v471
        %v488 = vmul.f32 %v440, %v472
        %v489 = vmul.f32 %v442, %v473
        %v490 = vmul.f32 %v444, %v474
        %v491 = vmul.f32 %v446, %v475
        %v492 = vmul.f32 %v450, %v476
        %v493 = vmul.f32 %v452, %v477
        %v494 = vmul.f32 %v454, %v478
        %v495 = vmul.f32 %v456, %v479
        %v496 = vmul.f32 %v460, %v480
        %v497 = vmul.f32 %v462, %v481
        %v498 = vmul.f32 %v464, %v482
        %v499 = vmul.f32 %v466, %v483
        %v500 = vmul.f32 %v484, 0.044715
        %v501 = vmul.f32 %v485, 0.044715
        %v502 = vmul.f32 %v486, 0.044715
        %v503 = vmul.f32 %v487, 0.044715
        %v504 = vmul.f32 %v488, 0.044715
        %v505 = vmul.f32 %v489, 0.044715
        %v506 = vmul.f32 %v490, 0.044715
        %v507 = vmul.f32 %v491, 0.044715
        %v508 = vmul.f32 %v492, 0.044715
        %v509 = vmul.f32 %v493, 0.044715
        %v510 = vmul.f32 %v494, 0.044715
        %v511 = vmul.f32 %v495, 0.044715
        %v512 = vmul.f32 %v496, 0.044715
        %v513 = vmul.f32 %v497, 0.044715
        %v514 = vmul.f32 %v498, 0.044715
        %v515 = vmul.f32 %v499, 0.044715
        %v516 = vadd.f32 %v430, %v500
        %v517 = vadd.f32 %v432, %v501
        %v518 = vadd.f32 %v434, %v502
        %v519 = vadd.f32 %v436, %v503
        %v520 = vadd.f32 %v440, %v504
        %v521 = vadd.f32 %v442, %v505
        %v522 = vadd.f32 %v444, %v506
        %v523 = vadd.f32 %v446, %v507
        %v524 = vadd.f32 %v450, %v508
        %v525 = vadd.f32 %v452, %v509
        %v526 = vadd.f32 %v454, %v510
        %v527 = vadd.f32 %v456, %v511
        %v528 = vadd.f32 %v460, %v512
        %v529 = vadd.f32 %v462, %v513
        %v530 = vadd.f32 %v464, %v514
        %v531 = vadd.f32 %v466, %v515
        %v532 = vmul.f32 %v516, 0.7978846
        %v533 = vmul.f32 %v517, 0.7978846
        %v534 = vmul.f32 %v518, 0.7978846
        %v535 = vmul.f32 %v519, 0.7978846
        %v536 = vmul.f32 %v520, 0.7978846
        %v537 = vmul.f32 %v521, 0.7978846
        %v538 = vmul.f32 %v522, 0.7978846
        %v539 = vmul.f32 %v523, 0.7978846
        %v540 = vmul.f32 %v524, 0.7978846
        %v541 = vmul.f32 %v525, 0.7978846
        %v542 = vmul.f32 %v526, 0.7978846
        %v543 = vmul.f32 %v527, 0.7978846
        %v544 = vmul.f32 %v528, 0.7978846
        %v545 = vmul.f32 %v529, 0.7978846
        %v546 = vmul.f32 %v530, 0.7978846
        %v547 = vmul.f32 %v531, 0.7978846
        %v548 = vtanh.pop %v532
        %v549 = vtanh.pop %v533
        %v550 = vtanh.pop %v534
        %v551 = vtanh.pop %v535
        %v552 = vtanh.pop %v536
        %v553 = vtanh.pop %v537
        %v554 = vtanh.pop %v538
        %v555 = vtanh.pop %v539
        %v556 = vtanh.pop %v540
        %v557 = vtanh.pop %v541
        %v558 = vtanh.pop %v542
        %v559 = vtanh.pop %v543
        %v560 = vtanh.pop %v544
        %v561 = vtanh.pop %v545
        %v562 = vtanh.pop %v546
        %v563 = vtanh.pop %v547
        %v564 = vadd.f32 %v548, 1.0
        %v565 = vadd.f32 %v549, 1.0
        %v566 = vadd.f32 %v550, 1.0
        %v567 = vadd.f32 %v551, 1.0
        %v568 = vadd.f32 %v552, 1.0
        %v569 = vadd.f32 %v553, 1.0
        %v570 = vadd.f32 %v554, 1.0
        %v571 = vadd.f32 %v555, 1.0
        %v572 = vadd.f32 %v556, 1.0
        %v573 = vadd.f32 %v557, 1.0
        %v574 = vadd.f32 %v558, 1.0
        %v575 = vadd.f32 %v559, 1.0
        %v576 = vadd.f32 %v560, 1.0
        %v577 = vadd.f32 %v561, 1.0
        %v578 = vadd.f32 %v562, 1.0
        %v579 = vadd.f32 %v563, 1.0
        %v580 = vmul.f32 %v564, 0.5
        %v581 = vmul.f32 %v565, 0.5
        %v582 = vmul.f32 %v566, 0.5
        %v583 = vmul.f32 %v567, 0.5
        %v584 = vmul.f32 %v568, 0.5
        %v585 = vmul.f32 %v569, 0.5
        %v586 = vmul.f32 %v570, 0.5
        %v587 = vmul.f32 %v571, 0.5
        %v588 = vmul.f32 %v572, 0.5
        %v589 = vmul.f32 %v573, 0.5
        %v590 = vmul.f32 %v574, 0.5
        %v591 = vmul.f32 %v575, 0.5
        %v592 = vmul.f32 %v576, 0.5
        %v593 = vmul.f32 %v577, 0.5
        %v594 = vmul.f32 %v578, 0.5
        %v595 = vmul.f32 %v579, 0.5
        %v596 = vmul.f32 %v430, %v580
        %v597 = vmul.f32 %v432, %v581
        %v598 = vmul.f32 %v434, %v582
        %v599 = vmul.f32 %v436, %v583
        %v600 = vmul.f32 %v440, %v584
        %v601 = vmul.f32 %v442, %v585
        %v602 = vmul.f32 %v444, %v586
        %v603 = vmul.f32 %v446, %v587
        %v604 = vmul.f32 %v450, %v588
        %v605 = vmul.f32 %v452, %v589
        %v606 = vmul.f32 %v454, %v590
        %v607 = vmul.f32 %v456, %v591
        %v608 = vmul.f32 %v460, %v592
        %v609 = vmul.f32 %v462, %v593
        %v610 = vmul.f32 %v464, %v594
        %v611 = vmul.f32 %v466, %v595
        %v612 = vpack.c.bf16 %v598, %v596
        %v613 = vpack.c.bf16 %v599, %v597
        %v614 = vpack.c.bf16 %v602, %v600
        %v615 = vpack.c.bf16 %v603, %v601
        %v616 = vpack.c.bf16 %v606, %v604
        %v617 = vpack.c.bf16 %v607, %v605
        %v618 = vpack.c.bf16 %v610, %v608
        %v619 = vpack.c.bf16 %v611, %v609
        %v620 = vld [vmem:[#allocation7] sm:$0xf]
        %v621 = vld [vmem:[#allocation7 + $0x4] sm:$0xf]
        %v622 = vld [vmem:[#allocation7 + $0x8] sm:$0xf]
        %v623 = vld [vmem:[#allocation7 + $0xc] sm:$0xf]
        %v624 = vld [vmem:[#allocation7 + $0x10] sm:$0xf]
        %v625 = vld [vmem:[#allocation7 + $0x14] sm:$0xf]
        %v626 = vld [vmem:[#allocation7 + $0x18] sm:$0xf]
        %v627 = vld [vmem:[#allocation7 + $0x1c] sm:$0xf]
        %v628 = vld [vmem:[#allocation7 + $0x20] sm:$0xf]
        %v629 = vld [vmem:[#allocation7 + $0x24] sm:$0xf]
        %v630 = vld [vmem:[#allocation7 + $0x28] sm:$0xf]
        %v631 = vld [vmem:[#allocation7 + $0x2c] sm:$0xf]
        %v632 = vld [vmem:[#allocation7 + $0x30] sm:$0xf]
        %v633 = vld [vmem:[#allocation7 + $0x34] sm:$0xf]
        %v634 = vld [vmem:[#allocation7 + $0x38] sm:$0xf]
        %v635 = vld [vmem:[#allocation7 + $0x3c] sm:$0xf]
        %v636 = vld [vmem:[#allocation7 + $0x40] sm:$0xf]
        %v637 = vld [vmem:[#allocation7 + $0x44] sm:$0xf]
        %v638 = vld [vmem:[#allocation7 + $0x48] sm:$0xf]
        %v639 = vld [vmem:[#allocation7 + $0x4c] sm:$0xf]
        %v640 = vld [vmem:[#allocation7 + $0x50] sm:$0xf]
        %v641 = vld [vmem:[#allocation7 + $0x54] sm:$0xf]
        %v642 = vld [vmem:[#allocation7 + $0x58] sm:$0xf]
        %v643 = vld [vmem:[#allocation7 + $0x5c] sm:$0xf]
        %v644 = vld [vmem:[#allocation7 + $0x60] sm:$0xf]
        %v645 = vld [vmem:[#allocation7 + $0x64] sm:$0xf]
        %v646 = vld [vmem:[#allocation7 + $0x68] sm:$0xf]
        %v647 = vld [vmem:[#allocation7 + $0x6c] sm:$0xf]
        %v648 = vld [vmem:[#allocation7 + $0x70] sm:$0xf]
        %v649 = vld [vmem:[#allocation7 + $0x74] sm:$0xf]
        %v650 = vld [vmem:[#allocation7 + $0x78] sm:$0xf]
        %v651 = vld [vmem:[#allocation7 + $0x7c] sm:$0xf]
        %v652 = vld [vmem:[%s4] sm:$0x1]
        %v654 = vlaneseq
        %v655 = vshrl.u32 %v654, 7
        %v656 = vsub.s32 0, %v655
        %v657 = vrot.slane %v652, %v656
        %v691 = vunpack.c.l.b16 %v620
        %v692 = vunpack.c.l.b16 %v621
        %v693 = vunpack.c.l.b16 %v622
        %v694 = vunpack.c.l.b16 %v623
        %v695 = vunpack.c.l.b16 %v624
        %v696 = vunpack.c.l.b16 %v625
        %v697 = vunpack.c.l.b16 %v626
        %v698 = vunpack.c.l.b16 %v627
        %v699 = vunpack.c.l.b16 %v628
        %v700 = vunpack.c.l.b16 %v629
        %v701 = vunpack.c.l.b16 %v630
        %v702 = vunpack.c.l.b16 %v631
        %v703 = vunpack.c.l.b16 %v632
        %v704 = vunpack.c.l.b16 %v633
        %v705 = vunpack.c.l.b16 %v634
        %v706 = vunpack.c.l.b16 %v635
        %v707 = vunpack.c.l.b16 %v636
        %v708 = vunpack.c.l.b16 %v637
        %v709 = vunpack.c.l.b16 %v638
        %v710 = vunpack.c.l.b16 %v639
        %v711 = vunpack.c.l.b16 %v640
        %v712 = vunpack.c.l.b16 %v641
        %v713 = vunpack.c.l.b16 %v642
        %v714 = vunpack.c.l.b16 %v643
        %v715 = vunpack.c.l.b16 %v644
        %v716 = vunpack.c.l.b16 %v645
        %v717 = vunpack.c.l.b16 %v646
        %v718 = vunpack.c.l.b16 %v647
        %v719 = vunpack.c.l.b16 %v648
        %v720 = vunpack.c.l.b16 %v649
        %v721 = vunpack.c.l.b16 %v650
        %v722 = vunpack.c.l.b16 %v651
        %v723 = vpack.c.b16 %v692, %v691
        %v724 = vpack.c.b16 %v694, %v693
        %v725 = vpack.c.b16 %v696, %v695
        %v726 = vpack.c.b16 %v698, %v697
        %v727 = vpack.c.b16 %v700, %v699
        %v728 = vpack.c.b16 %v702, %v701
        %v729 = vpack.c.b16 %v704, %v703
        %v730 = vpack.c.b16 %v706, %v705
        %v731 = vpack.c.b16 %v708, %v707
        %v732 = vpack.c.b16 %v710, %v709
        %v733 = vpack.c.b16 %v712, %v711
        %v734 = vpack.c.b16 %v714, %v713
        %v735 = vpack.c.b16 %v716, %v715
        %v736 = vpack.c.b16 %v718, %v717
        %v737 = vpack.c.b16 %v720, %v719
        %v738 = vpack.c.b16 %v722, %v721
        %755 = vmatprep.subr.bf16.mxu0 0
        %756 = vmatpush1.bf16.msra.mxu0 %v723
        %757 = vmatprep.subr.bf16.mxu0 0
        %758 = vmatpush1.bf16.msra.mxu0 %v724
        %759 = vmatprep.subr.bf16.mxu0 0
        %760 = vmatpush1.bf16.msra.mxu0 %v725
        %761 = vmatprep.subr.bf16.mxu0 0
        %762 = vmatpush1.bf16.msra.mxu0 %v726
        %763 = vmatprep.subr.bf16.mxu0 0
        %764 = vmatpush1.bf16.msra.mxu0 %v727
        %765 = vmatprep.subr.bf16.mxu0 0
        %766 = vmatpush1.bf16.msra.mxu0 %v728
        %767 = vmatprep.subr.bf16.mxu0 0
        %768 = vmatpush1.bf16.msra.mxu0 %v729
        %769 = vmatprep.subr.bf16.mxu0 0
        %770 = vmatpush1.bf16.msra.mxu0 %v730
        %771 = vmatprep.subr.bf16.mxu0 0
        %772 = vmatpush1.bf16.msra.mxu0 %v731
        %773 = vmatprep.subr.bf16.mxu0 0
        %774 = vmatpush1.bf16.msra.mxu0 %v732
        %775 = vmatprep.subr.bf16.mxu0 0
        %776 = vmatpush1.bf16.msra.mxu0 %v733
        %777 = vmatprep.subr.bf16.mxu0 0
        %778 = vmatpush1.bf16.msra.mxu0 %v734
        %779 = vmatprep.subr.bf16.mxu0 0
        %780 = vmatpush1.bf16.msra.mxu0 %v735
        %781 = vmatprep.subr.bf16.mxu0 0
        %782 = vmatpush1.bf16.msra.mxu0 %v736
        %783 = vmatprep.subr.bf16.mxu0 0
        %784 = vmatpush1.bf16.msra.mxu0 %v737
        %785 = vmatprep.subr.bf16.mxu0 0
        %786 = vmatpush1.bf16.msra.mxu0 %v738
        %787 = vmatprep.mubr.bf16.mxu0 %v613
        %788 = vmatmul.mubr.bf16.gmra.mrb[0].mxu0 %v612
        %v789 = vpop.f32.mrb[0].mxu0
        %v790 = vadd.f32 %v657, %v789
        %v791 = vpop.f32.mrb[0].mxu0
        %v792 = vpop.f32.mrb[0].mxu0
        %v793 = vadd.f32 %v657, %v792
        %v794 = vpop.f32.mrb[0].mxu0
        %795 = vmatprep.mubr.bf16.mxu0 %v615
        %796 = vmatmul.mubr.bf16.gmra.mrb[0].mxu0 %v614
        %v797 = vpop.f32.mrb[0].mxu0
        %v798 = vadd.f32 %v657, %v797
        %v799 = vpop.f32.mrb[0].mxu0
        %v800 = vpop.f32.mrb[0].mxu0
        %v801 = vadd.f32 %v657, %v800
        %v802 = vpop.f32.mrb[0].mxu0
        %803 = vmatprep.mubr.bf16.mxu0 %v617
        %804 = vmatmul.mubr.bf16.gmra.mrb[0].mxu0 %v616
        %v805 = vpop.f32.mrb[0].mxu0
        %v806 = vadd.f32 %v657, %v805
        %v807 = vpop.f32.mrb[0].mxu0
        %v808 = vpop.f32.mrb[0].mxu0
        %v809 = vadd.f32 %v657, %v808
        %v810 = vpop.f32.mrb[0].mxu0
        %811 = vmatprep.mubr.bf16.mxu0 %v619
        %812 = vmatmul.mubr.bf16.gmra.mrb[0].mxu0 %v618
        %v813 = vpop.f32.mrb[0].mxu0
        %v814 = vadd.f32 %v657, %v813
        %v815 = vpop.f32.mrb[0].mxu0
        %v816 = vpop.f32.mrb[0].mxu0
        %v817 = vadd.f32 %v657, %v816
        %v818 = vpop.f32.mrb[0].mxu0
        %819 = vdwg.mxu0
        %820 = vst [vmem:[%s271] sm:$0xff] %v790
        %821 = vst [vmem:[%s271 + $0x8] sm:$0xff] %v793
        %822 = vst [vmem:[%s271 + $0x10] sm:$0xff] %v798
        %823 = vst [vmem:[%s271 + $0x18] sm:$0xff] %v801
        %824 = vst [vmem:[%s271 + $0x20] sm:$0xff] %v806
        %825 = vst [vmem:[%s271 + $0x28] sm:$0xff] %v809
        %826 = vst [vmem:[%s271 + $0x30] sm:$0xff] %v814
        %827 = vst [vmem:[%s271 + $0x38] sm:$0xff] %v817
        %s828 = sand.u32 %s141, 1
        %s829 = scalar_lea.sflag [#allocation4], %s828
        %s830 = sand.u32 %s141, 1
        %s831 = smul.addr %s830, 64
        %s832 = scalar_lea.vmem [#allocation8], %s831
        // Predicated region
        $region53: #{expert_ffn_common_forward.1} parent=39 // pred_check
          %p833 = pneg %p151
        $region54: #{expert_ffn_common_forward.1} parent=39 // pred_check_branch
          %835 = sbr.rel (%p833) target = $region56
        $region55: #{expert_ffn_common_forward.1} parent=39 // pred_region
          %s836 = smul.u32 8, %s23
          %s838 = ssub.s32 1024, 1024
          %839 = vsyncadd %s829, %s838
          %s840 = smul.addr %s836, 128
          %s841 = scalar_lea.hbm %s5, %s840
          %s842 = sshll.u32 %s832, 4
          %s843 = int_to_ptr.vmem [resolvable:$true] %s842
          %848 = dma.vmem_to_hbm [thread:$0]  %s843, 1024, %s841, %s829, 128, 128, 8
        $region56: #{expert_ffn_common_forward.1} parent=39 // pred_fallthru
          _
      $region40: #{expert_ffn_common_forward.1} parent=5 // pred_fallthru
        _
      %p849 = scmp.le.s32.totalorder 2, %s18
      // Predicated region
      $region57: #{expert_ffn_common_forward.1} parent=5 // pred_check
        %p850 = pneg %p849
      $region58: #{expert_ffn_common_forward.1} parent=5 // pred_check_branch
        %852 = sbr.rel (%p850) target = $region60
      $region59: #{expert_ffn_common_forward.1} parent=5 // pred_region
        %s853 = ssub.s32 %s18, 2
        // Predicated region
        $region61: #{expert_ffn_common_forward.1} parent=59 // pred_check
          %p854 = pneg %p157
        $region62: #{expert_ffn_common_forward.1} parent=59 // pred_check_branch
          %856 = sbr.rel (%p854) target = $region64
        $region63: #{expert_ffn_common_forward.1} parent=59 // pred_region
          %s857 = sand.u32 %s142, 1
          %s858 = scalar_lea.sflag [#allocation4], %s857
          %s859 = sand.u32 %s142, 1
          %s860 = smul.addr %s859, 64
          %s861 = scalar_lea.vmem [#allocation8], %s860
          %862 = dma.done %s858, 1024
        $region64: #{expert_ffn_common_forward.1} parent=59 // pred_fallthru
          _
      $region60: #{expert_ffn_common_forward.1} parent=5 // pred_fallthru
        _
    $region6: #{expert_ffn_common_forward.1} parent=1 // loop_footer
      %s22 = sadd.s32 1, %s18
    $region7: #{expert_ffn_common_forward.1} parent=1 // loop_footer_branch
      %17 = sbr.rel target = $region3
    $region8: #{expert_ffn_common_forward.1} parent=1 // loop_exit
      _
    %863 = vsyncpa [#allocation3], 1
    %s864 = scalar_lea.sflag [#allocation3], 1
    %865 = vsyncpa %s864, 1
    %866 = vsyncpa [#allocation6], 1
    %867 = vsyncpa [#allocation4], 1
    %s868 = scalar_lea.sflag [#allocation4], 1
    %869 = vsyncpa %s868, 1

</llo_original>
